<compile_context>
chip_gen: v5e
topology: v5e:2x2
jax: 0.10.0
libtpu: 0.0.40
codegen_flags: <defaults>
</compile_context>

<pallas_src>
import functools

import jax
import jax.numpy as jnp
from jax.experimental import pallas as pl
from jax.experimental.pallas import tpu as pltpu

EPS = 1e-12      # F.normalize default eps (norm clamped to >= eps)
BN_EPS = 1e-5    # nn.BatchNorm1d default eps


def _round_up(x, m):
    return (x + m - 1) // m * m


def _model_kernel(x_ref, w_ref, b_ref,
                  feat_ref, con_ref, logit_ref, pred_ref, conf_ref,
                  *, C, C_pad, K):
    x = x_ref[...]                                              # (B, D) f32

    # --- F.normalize(inputs, p=2, dim=1) via rsqrt (EUP) -------------------
    inv = jax.lax.rsqrt(jnp.maximum(jnp.sum(x * x, axis=1, keepdims=True),
                                    EPS * EPS))
    feat = x * inv
    feat_ref[...] = feat

    # --- single fused MXU pass: [contrast | logits] (BN already folded) ----
    fused = jnp.dot(feat, w_ref[...], preferred_element_type=jnp.float32)
    fused = fused + b_ref[...]                                  # (B, C_pad+K_pad)

    # contrast branch: padded columns are exactly zero -> norm unaffected
    c = fused[:, :C]                                            # (B, C)
    cinv = jax.lax.rsqrt(jnp.maximum(jnp.sum(c * c, axis=1, keepdims=True),
                                     EPS * EPS))
    con_ref[...] = c * cinv

    # classifier branch
    logits = fused[:, C_pad:C_pad + K]                          # (B, K)
    logit_ref[...] = logits

    # --- softmax max / argmax without materializing probs ------------------
    m = jnp.max(logits, axis=1, keepdims=True)                  # (B, 1)
    s = jnp.sum(jnp.exp(logits - m), axis=1, keepdims=True)     # (B, 1)
    conf_ref[...] = pl.reciprocal(s)        # max prob = exp(m-m)/s = 1/s

    idx = jax.lax.broadcasted_iota(jnp.int32, logits.shape, 1)
    # first index attaining the max (matches torch.max tie behaviour)
    candidate = jnp.where(logits == m, idx, jnp.int32(K))
    pred_ref[...] = jnp.min(candidate, axis=1, keepdims=True).astype(jnp.int32)


def prepare_params(wc, bc, gamma, beta, wk, bk,
                   running_mean=None, running_var=None, bn_eps=BN_EPS):
    """One-time parameter prep: fold BN affine into Wc/bc and fuse Wc|Wk into a
    single 128-lane-padded weight/bias pair."""
    D, C = wc.shape
    K = wk.shape[1]
    if running_mean is None:
        running_mean = jnp.zeros((C,), jnp.float32)
    if running_var is None:
        running_var = jnp.ones((C,), jnp.float32)

    scale = gamma / jnp.sqrt(running_var + bn_eps)
    shift = beta - running_mean * scale
    wc_f = wc * scale[None, :]
    bc_f = bc * scale + shift

    C_pad = _round_up(C, 128)
    K_pad = _round_up(K, 128)
    w = jnp.zeros((D, C_pad + K_pad), jnp.float32)
    w = w.at[:, :C].set(wc_f.astype(jnp.float32))
    w = w.at[:, C_pad:C_pad + K].set(wk.astype(jnp.float32))
    b = jnp.zeros((1, C_pad + K_pad), jnp.float32)
    b = b.at[0, :C].set(bc_f.astype(jnp.float32))
    b = b.at[0, C_pad:C_pad + K].set(bk.astype(jnp.float32))
    return w, b, C, C_pad, K


def model_forward(x, w_fused, b_fused, C, C_pad, K):
    B, D = x.shape
    vmem = lambda: pl.BlockSpec(memory_space=pltpu.MemorySpace.VMEM)

    outs = pl.pallas_call(
        functools.partial(_model_kernel, C=C, C_pad=C_pad, K=K),
        out_shape=(
            jax.ShapeDtypeStruct((B, D), jnp.float32),   # features
            jax.ShapeDtypeStruct((B, C), jnp.float32),   # contrast_features
            jax.ShapeDtypeStruct((B, K), jnp.float32),   # logits
            jax.ShapeDtypeStruct((B, 1), jnp.int32),     # predictions
            jax.ShapeDtypeStruct((B, 1), jnp.float32),   # confidences
        ),
        in_specs=[vmem(), vmem(), vmem()],
        out_specs=(vmem(), vmem(), vmem(), vmem(), vmem()),
    )(x, w_fused, b_fused)

    features, contrast_features, logits, pred, conf = outs
    return {
        "features": features,
        "contrast_features": contrast_features,
        "logits": logits,
        "predictions": pred.reshape(B),
        "confidences": conf.reshape(B),
    }


if __name__ == "__main__":
    # Small shapes consistent with the module: base_network.out_dim -> D,
    # contrast_dim -> C, num_classes -> K.
    B, D, C, K = 8, 32, 128, 2

    key = jax.random.PRNGKey(0)
    kx, kwc, kwk = jax.random.split(key, 3)

    x = jax.random.normal(kx, (B, D), dtype=jnp.float32)

    # Deterministic parameter init (initialize_layer ~ small normal weights,
    # zero bias; BN: gamma=1, beta=0, running mean=0, var=1).
    wc = 0.01 * jax.random.normal(kwc, (D, C), dtype=jnp.float32)
    bc = jnp.zeros((C,), dtype=jnp.float32)
    gamma = jnp.ones((C,), dtype=jnp.float32)
    beta = jnp.zeros((C,), dtype=jnp.float32)
    wk = 0.01 * jax.random.normal(kwk, (D, K), dtype=jnp.float32)
    bk = jnp.zeros((K,), dtype=jnp.float32)

    w_fused, b_fused, C_, C_pad, K_ = prepare_params(wc, bc, gamma, beta, wk, bk)
    out = model_forward(x, w_fused, b_fused, C_, C_pad, K_)
    jax.block_until_ready(out)

    # Plain-JAX reference (eval-mode PyTorch semantics, incl. BN eps).
    feat_ref = x / jnp.maximum(jnp.linalg.norm(x, axis=1, keepdims=True), EPS)
    bn_scale = gamma / jnp.sqrt(1.0 + BN_EPS)           # running var = 1
    c_ref = (feat_ref @ wc + bc) * bn_scale + beta      # running mean = 0
    c_ref = c_ref / jnp.maximum(jnp.linalg.norm(c_ref, axis=1, keepdims=True), EPS)
    logits_ref = feat_ref @ wk + bk
    probs_ref = jax.nn.softmax(logits_ref, axis=1)

    assert jnp.allclose(out["features"], feat_ref, atol=1e-5)
    assert jnp.allclose(out["contrast_features"], c_ref, atol=1e-5)
    assert jnp.allclose(out["logits"], logits_ref, atol=1e-5)
    assert jnp.allclose(out["confidences"], jnp.max(probs_ref, axis=1), atol=1e-5)
    assert jnp.all(out["predictions"] == jnp.argmax(probs_ref, axis=1))

    print("KERNEL_OK")
</pallas_src>

<mosaic_0001>
module attributes {stable_mosaic.version = 11 : i64} {
  func.func @_model_kernel(%arg0: memref<8x32xf32, #tpu.memory_space<vmem>>, %arg1: memref<32x256xf32, #tpu.memory_space<vmem>>, %arg2: memref<1x256xf32, #tpu.memory_space<vmem>>, %arg3: memref<8x32xf32, #tpu.memory_space<vmem>>, %arg4: memref<8x128xf32, #tpu.memory_space<vmem>>, %arg5: memref<8x2xf32, #tpu.memory_space<vmem>>, %arg6: memref<8x1xi32, #tpu.memory_space<vmem>>, %arg7: memref<8x1xf32, #tpu.memory_space<vmem>>) attributes {dimension_semantics = [], scalar_prefetch = 0 : i64, scratch_operands = 0 : i64, tpu.core_type = #tpu.core_type<tc>} {
    %c0 = arith.constant 0 : index
    %c0_0 = arith.constant 0 : index
    %0 = vector.load %arg0[%c0, %c0_0] : memref<8x32xf32, #tpu.memory_space<vmem>>, vector<8x32xf32>
    %1 = arith.mulf %0, %0 : vector<8x32xf32>
    %cst = arith.constant dense<0.000000e+00> : vector<8xf32>
    %2 = vector.multi_reduction <add>, %1, %cst [1] : vector<8x32xf32> to vector<8xf32>
    %3 = vector.shape_cast %2 : vector<8xf32> to vector<8x1xf32>
    %cst_1 = arith.constant 1.000000e-24 : f32
    %4 = vector.broadcast %cst_1 : f32 to vector<8x1xf32>
    %5 = arith.maximumf %3, %4 : vector<8x1xf32>
    %6 = math.rsqrt %5 : vector<8x1xf32>
    %7 = vector.broadcast %6 : vector<8x1xf32> to vector<8x32xf32>
    %8 = arith.mulf %0, %7 : vector<8x32xf32>
    %c0_2 = arith.constant 0 : index
    %c0_3 = arith.constant 0 : index
    %9 = vector.load %arg3[%c0_2, %c0_3] : memref<8x32xf32, #tpu.memory_space<vmem>>, vector<8x32xf32>
    tpu.vector_store %arg3[%c0_2, %c0_3], %8 {strides = array<i32>} : memref<8x32xf32, #tpu.memory_space<vmem>>, vector<8x32xf32>,
    %c0_4 = arith.constant 0 : index
    %c0_5 = arith.constant 0 : index
    %10 = vector.load %arg1[%c0_4, %c0_5] : memref<32x256xf32, #tpu.memory_space<vmem>>, vector<32x256xf32>
    %cst_6 = arith.constant dense<0.000000e+00> : vector<8x256xf32>
    %11 = tpu.matmul %8, %10, %cst_6 {dimension_numbers = #tpu.dot_dimension_numbers<[1], [0], [0], [1], [0, 0, 1, 1], [], []>} : vector<8x32xf32>, vector<32x256xf32>, vector<8x256xf32> -> vector<8x256xf32>
    %c0_7 = arith.constant 0 : index
    %c0_8 = arith.constant 0 : index
    %12 = vector.load %arg2[%c0_7, %c0_8] : memref<1x256xf32, #tpu.memory_space<vmem>>, vector<1x256xf32>
    %13 = vector.broadcast %12 : vector<1x256xf32> to vector<8x256xf32>
    %14 = arith.addf %11, %13 : vector<8x256xf32>
    %15 = vector.extract_strided_slice %14 {offsets = [0, 0], sizes = [8, 128], strides = [1, 1]} : vector<8x256xf32> to vector<8x128xf32>
    %16 = arith.mulf %15, %15 : vector<8x128xf32>
    %cst_9 = arith.constant dense<0.000000e+00> : vector<8xf32>
    %17 = vector.multi_reduction <add>, %16, %cst_9 [1] : vector<8x128xf32> to vector<8xf32>
    %18 = vector.shape_cast %17 : vector<8xf32> to vector<8x1xf32>
    %cst_10 = arith.constant 1.000000e-24 : f32
    %19 = vector.broadcast %cst_10 : f32 to vector<8x1xf32>
    %20 = arith.maximumf %18, %19 : vector<8x1xf32>
    %21 = math.rsqrt %20 : vector<8x1xf32>
    %22 = vector.broadcast %21 : vector<8x1xf32> to vector<8x128xf32>
    %23 = arith.mulf %15, %22 : vector<8x128xf32>
    %c0_11 = arith.constant 0 : index
    %c0_12 = arith.constant 0 : index
    %24 = vector.load %arg4[%c0_11, %c0_12] : memref<8x128xf32, #tpu.memory_space<vmem>>, vector<8x128xf32>
    tpu.vector_store %arg4[%c0_11, %c0_12], %23 {strides = array<i32>} : memref<8x128xf32, #tpu.memory_space<vmem>>, vector<8x128xf32>,
    %25 = vector.extract_strided_slice %14 {offsets = [0, 128], sizes = [8, 2], strides = [1, 1]} : vector<8x256xf32> to vector<8x2xf32>
    %c0_13 = arith.constant 0 : index
    %c0_14 = arith.constant 0 : index
    %26 = vector.load %arg5[%c0_13, %c0_14] : memref<8x2xf32, #tpu.memory_space<vmem>>, vector<8x2xf32>
    tpu.vector_store %arg5[%c0_13, %c0_14], %25 {strides = array<i32>} : memref<8x2xf32, #tpu.memory_space<vmem>>, vector<8x2xf32>,
    %cst_15 = arith.constant dense<0xFF800000> : vector<8xf32>
    %27 = vector.multi_reduction <maximumf>, %25, %cst_15 [1] : vector<8x2xf32> to vector<8xf32>
    %28 = vector.shape_cast %27 : vector<8xf32> to vector<8x1xf32>
    %29 = vector.broadcast %28 : vector<8x1xf32> to vector<8x2xf32>
    %30 = arith.subf %25, %29 : vector<8x2xf32>
    %31 = math.exp %30 : vector<8x2xf32>
    %cst_16 = arith.constant dense<0.000000e+00> : vector<8xf32>
    %32 = vector.multi_reduction <add>, %31, %cst_16 [1] : vector<8x2xf32> to vector<8xf32>
    %33 = vector.shape_cast %32 : vector<8xf32> to vector<8x1xf32>
    %34 = tpu.reciprocal %33 : vector<8x1xf32> -> vector<8x1xf32>
    %c0_17 = arith.constant 0 : index
    %c0_18 = arith.constant 0 : index
    %35 = vector.load %arg7[%c0_17, %c0_18] : memref<8x1xf32, #tpu.memory_space<vmem>>, vector<8x1xf32>
    tpu.vector_store %arg7[%c0_17, %c0_18], %34 {strides = array<i32>} : memref<8x1xf32, #tpu.memory_space<vmem>>, vector<8x1xf32>,
    %36 = tpu.iota {dimensions = array<i32: 1>} : vector<8x2xi32>
    %37 = vector.broadcast %28 : vector<8x1xf32> to vector<8x2xf32>
    %38 = arith.cmpf oeq, %25, %37 : vector<8x2xf32>
    %c2_i32 = arith.constant 2 : i32
    %39 = vector.broadcast %c2_i32 : i32 to vector<8x2xi32>
    %40 = arith.select %38, %36, %39 : vector<8x2xi1>, vector<8x2xi32>
    %cst_19 = arith.constant dense<2147483647> : vector<8xi32>
    %41 = vector.multi_reduction <minsi>, %40, %cst_19 [1] : vector<8x2xi32> to vector<8xi32>
    %42 = vector.shape_cast %41 : vector<8xi32> to vector<8x1xi32>
    %c0_20 = arith.constant 0 : index
    %c0_21 = arith.constant 0 : index
    %43 = vector.load %arg6[%c0_20, %c0_21] : memref<8x1xi32, #tpu.memory_space<vmem>>, vector<8x1xi32>
    tpu.vector_store %arg6[%c0_20, %c0_21], %42 {strides = array<i32>} : memref<8x1xi32, #tpu.memory_space<vmem>>, vector<8x1xi32>,
    return
  }
}

</mosaic_0001>

<llo_original>
// kernel: tpu_custom_call.1
$region0: #{tpu_custom_call.1}
  #allocation0 [shape = 'u32[]', space=smem, size = 0x4, offset = 0x4, fixed_abs, tag = 'smem constant byte address 0x4 - core index']
  #allocation1 [shape = 'u32[72,128]{1,0:T(1,128)}', space=vmem, size = 0x9000, scoped, tag = 'internal scratch']
  %s0 = inlined_call_operand.hbm [shape: f32[8,32], index: 0, kind: input, shape index: {}]
  %s1 = inlined_call_operand.hbm [shape: f32[32,256], index: 1, kind: input, shape index: {}]
  %s2 = inlined_call_operand.hbm [shape: f32[1,256], index: 2, kind: input, shape index: {}]
  %s3 = inlined_call_operand.hbm [shape: f32[8,32], index: 3, kind: output, shape index: {0}]
  %s4 = inlined_call_operand.hbm [shape: f32[8,128], index: 4, kind: output, shape index: {1}]
  %s5 = inlined_call_operand.vmem [shape: f32[8,2], index: 5, kind: output, shape index: {2}]
  %s6 = inlined_call_operand.vmem [shape: s32[8,1], index: 6, kind: output, shape index: {3}]
  %s7 = inlined_call_operand.vmem [shape: f32[8,1], index: 7, kind: output, shape index: {4}]
  %8 = xla_tuple %s3, %s4, %s5, %s6, %s7
  %s9 = sld [smem:[#allocation0]]
  $region66: #{tpu_custom_call.1} parent=0
    _
  %s11 = ssub.s32 1, %s9
  %s12 = scalar_select 0, %s11, %s9
  $region1: #{tpu_custom_call.1} parent=0
    #allocation2 [shape = 'u8[4096]{0}', space=vmem, size = 0x1000, scoped, tag = 'input window, operand 0, single buffered']
    #allocation3 [shape = 's32[1]{0}', space=sflag, size = 0x4, scoped, tag = 'scoped memory for tpu_custom_call.1']
    #allocation4 [shape = 's32[1]{0}', space=sflag, size = 0x4, scoped, tag = 'scoped memory for tpu_custom_call.1']
    #allocation5 [shape = 'u8[32768]{0}', space=vmem, size = 0x8000, scoped, tag = 'input window, operand 1, single buffered']
    #allocation6 [shape = 's32[1]{0}', space=sflag, size = 0x4, scoped, tag = 'scoped memory for tpu_custom_call.1']
    #allocation7 [shape = 'u8[1024]{0}', space=vmem, size = 0x400, scoped, tag = 'input window, operand 2, single buffered']
    #allocation8 [shape = 'u8[4096]{0}', space=vmem, size = 0x1000, scoped, tag = 'output window, operand 0, single buffered']
    #allocation9 [shape = 'u8[4096]{0}', space=vmem, size = 0x1000, scoped, tag = 'output window, operand 1, single buffered']
    #allocation10 [shape = 's32[1]{0}', space=sflag, size = 0x4, scoped, tag = 'scoped memory for tpu_custom_call.1']
    %13 = vsyncpa [#allocation3], 0
    %14 = vsyncpa [#allocation6], 0
    %15 = vsyncpa [#allocation4], 0
    %16 = vsyncpa [#allocation10], 0
    // Predicated region
    $region2: #{tpu_custom_call.1} parent=1 // pred_check
      _
    $region3: #{tpu_custom_call.1} parent=1 // pred_check_branch
      %18 = sbr.rel (0) target = $region5
    $region4: #{tpu_custom_call.1} parent=1 // pred_region
      %20 = vsyncadd [#allocation3], 0
      %s22 = sshll.u32 %s0, 4
      %s23 = int_to_ptr.hbm [resolvable:$true] %s22
      %s24 = sshll.u32 [#allocation2], 4
      %s25 = int_to_ptr.vmem [resolvable:$true] %s24
      %27 = dma.hbm_to_vmem [thread:$0]  %s23, 128, %s25, [#allocation3]
    $region5: #{tpu_custom_call.1} parent=1 // pred_fallthru
      _
    // Predicated region
    $region6: #{tpu_custom_call.1} parent=1 // pred_check
      _
    $region7: #{tpu_custom_call.1} parent=1 // pred_check_branch
      %29 = sbr.rel (0) target = $region9
    $region8: #{tpu_custom_call.1} parent=1 // pred_region
      %31 = vsyncadd [#allocation6], 0
      %s32 = sshll.u32 %s1, 4
      %s33 = int_to_ptr.hbm [resolvable:$true] %s32
      %s34 = sshll.u32 [#allocation5], 4
      %s35 = int_to_ptr.vmem [resolvable:$true] %s34
      %40 = dma.hbm_to_vmem [thread:$0]  %s33, 1024, %s35, [#allocation6], 256, 256, 16
    $region9: #{tpu_custom_call.1} parent=1 // pred_fallthru
      _
    // Predicated region
    $region10: #{tpu_custom_call.1} parent=1 // pred_check
      _
    $region11: #{tpu_custom_call.1} parent=1 // pred_check_branch
      %42 = sbr.rel (0) target = $region13
    $region12: #{tpu_custom_call.1} parent=1 // pred_region
      %44 = vsyncadd [#allocation6], 0
      %s46 = sshll.u32 %s2, 4
      %s47 = int_to_ptr.hbm [resolvable:$true] %s46
      %s48 = sshll.u32 [#allocation7], 4
      %s49 = int_to_ptr.vmem [resolvable:$true] %s48
      %51 = dma.hbm_to_vmem [thread:$0]  %s47, 32, %s49, [#allocation6]
    $region13: #{tpu_custom_call.1} parent=1 // pred_fallthru
      _
    // Predicated region
    $region14: #{tpu_custom_call.1} parent=1 // pred_check
      _
    $region15: #{tpu_custom_call.1} parent=1 // pred_check_branch
      %53 = sbr.rel (0) target = $region17
    $region16: #{tpu_custom_call.1} parent=1 // pred_region
      %55 = dma.done [#allocation3], 128
    $region17: #{tpu_custom_call.1} parent=1 // pred_fallthru
      _
    // Predicated region
    $region18: #{tpu_custom_call.1} parent=1 // pred_check
      _
    $region19: #{tpu_custom_call.1} parent=1 // pred_check_branch
      %57 = sbr.rel (0) target = $region21
    $region20: #{tpu_custom_call.1} parent=1 // pred_region
      %59 = dma.done [#allocation6], 1024
    $region21: #{tpu_custom_call.1} parent=1 // pred_fallthru
      _
    // Predicated region
    $region22: #{tpu_custom_call.1} parent=1 // pred_check
      _
    $region23: #{tpu_custom_call.1} parent=1 // pred_check_branch
      %61 = sbr.rel (0) target = $region25
    $region24: #{tpu_custom_call.1} parent=1 // pred_region
      %63 = dma.done [#allocation6], 32
    $region25: #{tpu_custom_call.1} parent=1 // pred_fallthru
      _
    %v64 = vld [vmem:[#allocation2] sm:$0xff]
    %v65 = vmul.f32 %v64, %v64
    %vm66 = vcmask 261120
    %v67 = vsel %vm66, %v65, 0.0
    %68 = vadd.xlane.f32.xlu0 %v67
    %v69 = vpop.xlane.xlu0 %68
    %v70 = vmax.f32 %v69, 1e-24
    %v71 = vrsqrt.pop %v70
    %v72 = vmul.f32 %v71, %v70
    %v73 = vmul.f32 %v72, %v71
    %v74 = vmul.f32 0.5, %v73
    %v75 = vsub.f32 1.5, %v74
    %v76 = vmul.f32 %v71, %v75
    %vm77 = vweird.f32 %v70
    %vm78 = vweird.f32 %v71
    %vm79 = vmor %vm77, %vm78
    %v80 = vsel %vm79, %v71, %v76
    %v81 = vmul.f32 %v64, %v80
    %82 = vst.msk [vmem:[#allocation8] sm:$0xff] %vm66, %v81
    %v83 = vld [vmem:[#allocation5] sm:$0xff]
    %v84 = vld [vmem:[#allocation5 + $0x8] sm:$0xff]
    %v85 = vld [vmem:[#allocation5 + $0x10] sm:$0xff]
    %v86 = vld [vmem:[#allocation5 + $0x18] sm:$0xff]
    %v87 = vld [vmem:[#allocation5 + $0x20] sm:$0xff]
    %v88 = vld [vmem:[#allocation5 + $0x28] sm:$0xff]
    %v89 = vld [vmem:[#allocation5 + $0x30] sm:$0xff]
    %v90 = vld [vmem:[#allocation5 + $0x38] sm:$0xff]
    %v91 = vld [vmem:[#allocation7] sm:$0x3]
    %v93 = vperm.slane %v91, 0
    %v94 = vperm.slane %v91, 1
    %v98 = vsel %vm66, %v81, 0
    %100 = vmatpush.msra.mxu0 0.0
    %101 = vmatpush.msra.mxu0 0.0
    %102 = vmatpush.msra.mxu0 0.0
    %103 = vmatpush.msra.mxu0 0.0
    %104 = vmatpush.msra.mxu0 0.0
    %105 = vmatpush.msra.mxu0 0.0
    %106 = vmatpush.msra.mxu0 0.0
    %107 = vmatpush.msra.mxu0 0.0
    %108 = vmatpush.msra.mxu0 0.0
    %109 = vmatpush.msra.mxu0 0.0
    %110 = vmatpush.msra.mxu0 0.0
    %111 = vmatpush.msra.mxu0 0.0
    %112 = vmatpush.msra.mxu0 %v89
    %113 = vmatpush.msra.mxu0 %v87
    %114 = vmatpush.msra.mxu0 %v85
    %115 = vmatpush.msra.mxu0 %v83
    %116 = vmatmul.f32.gmra.mxu0 %v98
    %v117 = vpop.f32.mrf.mxu0
    %v118 = vadd.f32 %v93, %v117
    %119 = vdwg.mxu0
    %120 = vmatpush.msra.mxu0 0.0
    %121 = vmatpush.msra.mxu0 0.0
    %122 = vmatpush.msra.mxu0 0.0
    %123 = vmatpush.msra.mxu0 0.0
    %124 = vmatpush.msra.mxu0 0.0
    %125 = vmatpush.msra.mxu0 0.0
    %126 = vmatpush.msra.mxu0 0.0
    %127 = vmatpush.msra.mxu0 0.0
    %128 = vmatpush.msra.mxu0 0.0
    %129 = vmatpush.msra.mxu0 0.0
    %130 = vmatpush.msra.mxu0 0.0
    %131 = vmatpush.msra.mxu0 0.0
    %132 = vmatpush.msra.mxu0 %v90
    %133 = vmatpush.msra.mxu0 %v88
    %134 = vmatpush.msra.mxu0 %v86
    %135 = vmatpush.msra.mxu0 %v84
    %136 = vmatmul.f32.gmra.mxu0 %v98
    %v137 = vpop.f32.mrf.mxu0
    %v138 = vadd.f32 %v94, %v137
    %139 = vdwg.mxu0
    %v140 = vmul.f32 %v118, %v118
    %141 = vadd.xlane.f32.xlu0 %v140
    %v142 = vpop.xlane.xlu0 %141
    %v143 = vmax.f32 %v142, 1e-24
    %v144 = vrsqrt.pop %v143
    %v145 = vmul.f32 %v144, %v143
    %v146 = vmul.f32 %v145, %v144
    %v147 = vmul.f32 0.5, %v146
    %v148 = vsub.f32 1.5, %v147
    %v149 = vmul.f32 %v144, %v148
    %vm150 = vweird.f32 %v143
    %vm151 = vweird.f32 %v144
    %vm152 = vmor %vm150, %vm151
    %v153 = vsel %vm152, %v144, %v149
    %v154 = vmul.f32 %v118, %v153
    %155 = vst [vmem:[#allocation9] sm:$0xff] %v154
    %vm156 = vcmask 15360
    %157 = vst.msk [vmem:[%s5] sm:$0xff] %vm156, %v138
    %v158 = vsel %vm156, %v138, -inf
    %159 = vmax.xlane.f32.xlu0 %v158
    %v160 = vpop.xlane.xlu0 %159
    %v161 = vsub.f32 %v138, %v160
    %v162 = vmul.f32 %v161, 1.442695
    %v163 = vpow.pop %v162
    %v164 = vsel %vm156, %v163, 0.0
    %165 = vadd.xlane.f32.xlu0 %v164
    %v166 = vpop.xlane.xlu0 %165
    %v167 = vrcp.pop %v166
    %v168 = vmul.f32 %v166, %v167
    %v169 = vsub.f32 1.0, %v168
    %v170 = vmul.f32 %v167, %v169
    %v171 = vadd.f32 %v167, %v170
    %vm172 = vweird.f32 %v166
    %vm173 = vweird.f32 %v167
    %vm174 = vmor %vm172, %vm173
    %v175 = vsel %vm174, %v167, %v171
    %v176 = vand.u32 2147483647, %v166
    %vm177 = vcmp.eq.f32.partialorder %v176, 8.507059e+37
    %v178 = vand.u32 %v166, 2147483648
    %v179 = vor.u32 1.1754944e-38, %v178
    %v180 = vsel %vm177, %v179, %v175
    %vm181 = vcmask 7168
    %182 = vst.msk [vmem:[%s7] sm:$0xff] %vm181, %v180
    %v183 = vlaneseq
    %v184 = vand.u32 %v183, 127
    %vm185 = vcmp.eq.f32.partialorder %v138, %v160
    %v186 = vsel %vm185, %v184, 2
    %v187 = vsel %vm156, %v186, 2147483647
    %v188 = vand.u32 %v187, 65535
    %v189 = vshra.s32 %v187, 16
    %v190 = vcvt.s32.f32 %v188
    %v191 = vcvt.s32.f32 %v189
    %192 = vmin.xlane.f32.xlu0 %v191
    %v193 = vpop.xlane.xlu0 %192
    %vm194 = vcmp.eq.f32.partialorder %v191, %v193
    %v195 = vsel %vm194, %v190, inf
    %196 = vmin.xlane.f32.xlu0 %v195
    %v197 = vpop.xlane.xlu0 %196
    %v198 = vcvt.f32.s32 %v197
    %v199 = vcvt.f32.s32 %v193
    %v200 = vshll.u32 %v199, 16
    %v201 = vadd.s32 %v200, %v198
    %202 = vst.msk [vmem:[%s6] sm:$0xff] %vm181, %v201
    // Predicated region
    $region26: #{tpu_custom_call.1} parent=1 // pred_check
      _
    $region27: #{tpu_custom_call.1} parent=1 // pred_check_branch
      %204 = sbr.rel (0) target = $region29
    $region28: #{tpu_custom_call.1} parent=1 // pred_region
      %206 = vsyncadd [#allocation4], 0
      %s208 = sshll.u32 [#allocation8], 4
      %s209 = int_to_ptr.vmem [resolvable:$true] %s208
      %s210 = sshll.u32 %s3, 4
      %s211 = int_to_ptr.hbm [resolvable:$true] %s210
      %213 = dma.vmem_to_hbm [thread:$0]  %s209, 128, %s211, [#allocation4]
    $region29: #{tpu_custom_call.1} parent=1 // pred_fallthru
      _
    // Predicated region
    $region30: #{tpu_custom_call.1} parent=1 // pred_check
      _
    $region31: #{tpu_custom_call.1} parent=1 // pred_check_branch
      %215 = sbr.rel (0) target = $region33
    $region32: #{tpu_custom_call.1} parent=1 // pred_region
      %217 = vsyncadd [#allocation10], 0
      %s219 = sshll.u32 [#allocation9], 4
      %s220 = int_to_ptr.vmem [resolvable:$true] %s219
      %s221 = sshll.u32 %s4, 4
      %s222 = int_to_ptr.hbm [resolvable:$true] %s221
      %224 = dma.vmem_to_hbm [thread:$0]  %s220, 128, %s222, [#allocation10]
    $region33: #{tpu_custom_call.1} parent=1 // pred_fallthru
      _
    // Predicated region
    $region34: #{tpu_custom_call.1} parent=1 // pred_check
      _
    $region35: #{tpu_custom_call.1} parent=1 // pred_check_branch
      %226 = sbr.rel (0) target = $region37
    $region36: #{tpu_custom_call.1} parent=1 // pred_region
      _
    $region37: #{tpu_custom_call.1} parent=1 // pred_fallthru
      _
    // Predicated region
    $region38: #{tpu_custom_call.1} parent=1 // pred_check
      _
    $region39: #{tpu_custom_call.1} parent=1 // pred_check_branch
      %228 = sbr.rel (0) target = $region41
    $region40: #{tpu_custom_call.1} parent=1 // pred_region
      _
    $region41: #{tpu_custom_call.1} parent=1 // pred_fallthru
      _
    // Predicated region
    $region42: #{tpu_custom_call.1} parent=1 // pred_check
      _
    $region43: #{tpu_custom_call.1} parent=1 // pred_check_branch
      %230 = sbr.rel (0) target = $region45
    $region44: #{tpu_custom_call.1} parent=1 // pred_region
      _
    $region45: #{tpu_custom_call.1} parent=1 // pred_fallthru
      _
    // Predicated region
    $region46: #{tpu_custom_call.1} parent=1 // pred_check
      _
    $region47: #{tpu_custom_call.1} parent=1 // pred_check_branch
      %232 = sbr.rel (0) target = $region49
    $region48: #{tpu_custom_call.1} parent=1 // pred_region
      %234 = dma.done [#allocation4], 128
    $region49: #{tpu_custom_call.1} parent=1 // pred_fallthru
      _
    // Predicated region
    $region50: #{tpu_custom_call.1} parent=1 // pred_check
      _
    $region51: #{tpu_custom_call.1} parent=1 // pred_check_branch
      %236 = sbr.rel (0) target = $region53
    $region52: #{tpu_custom_call.1} parent=1 // pred_region
      %238 = dma.done [#allocation10], 128
    $region53: #{tpu_custom_call.1} parent=1 // pred_fallthru
      _
    // Predicated region
    $region54: #{tpu_custom_call.1} parent=1 // pred_check
      _
    $region55: #{tpu_custom_call.1} parent=1 // pred_check_branch
      %240 = sbr.rel (0) target = $region57
    $region56: #{tpu_custom_call.1} parent=1 // pred_region
      _
    $region57: #{tpu_custom_call.1} parent=1 // pred_fallthru
      _
    // Predicated region
    $region58: #{tpu_custom_call.1} parent=1 // pred_check
      _
    $region59: #{tpu_custom_call.1} parent=1 // pred_check_branch
      %242 = sbr.rel (0) target = $region61
    $region60: #{tpu_custom_call.1} parent=1 // pred_region
      _
    $region61: #{tpu_custom_call.1} parent=1 // pred_fallthru
      _
    // Predicated region
    $region62: #{tpu_custom_call.1} parent=1 // pred_check
      _
    $region63: #{tpu_custom_call.1} parent=1 // pred_check_branch
      %244 = sbr.rel (0) target = $region65
    $region64: #{tpu_custom_call.1} parent=1 // pred_region
      _
    $region65: #{tpu_custom_call.1} parent=1 // pred_fallthru
      _
    %245 = vsyncpa [#allocation3], 1
    %246 = vsyncpa [#allocation6], 1
    %247 = vsyncpa [#allocation4], 1
    %248 = vsyncpa [#allocation10], 1

</llo_original>
